<compile_context>
chip_gen: v6e
topology: v6e:2x2x1
jax: 0.10.0
libtpu: 0.0.40
codegen_flags: <defaults>
</compile_context>

<pallas_src>
import functools

import jax
import jax.numpy as jnp
from jax import lax
from jax.experimental import pallas as pl
from jax.experimental.pallas import tpu as pltpu


def _round_up(x, m):
    return ((x + m - 1) // m) * m


# ---------------------------------------------------------------------------
# Pallas kernel: (N, M, OC, K) tiled "NT" matmul with f32 VMEM accumulator + bias
# ---------------------------------------------------------------------------
def _conv_matmul_kernel(a_ref, b_ref, bias_ref, o_ref, acc_ref, *, k_valid, tk, mask_k):
    # a_ref:    (1, tm, tk) bf16   patch rows for this spatial tile
    # b_ref:    (tn, tk)    bf16   weight rows (OC-major)
    # bias_ref: (tn, 1)     f32
    # o_ref:    (1, tn, tm)        output tile, channel-major (lane dim = spatial)
    # acc_ref:  (tn, tm)    f32    scratch, resident across K steps
    k = pl.program_id(3)

    @pl.when(k == 0)
    def _():
        acc_ref[...] = jnp.zeros_like(acc_ref)

    a = a_ref[0]
    if mask_k:
        # Zero the ragged K tail (unspecified data read past the array edge).
        col = k * tk + lax.broadcasted_iota(jnp.int32, a.shape, 1)
        a = jnp.where(col < k_valid, a, jnp.zeros_like(a))

    # (tn, tk) x (tm, tk) contracted on the K dims -> (tn, tm); native MXU "NT" matmul,
    # result is already channel-major so no output transpose is needed.
    acc_ref[...] += lax.dot_general(
        b_ref[...], a, (((1,), (1,)), ((), ())),
        preferred_element_type=jnp.float32)

    @pl.when(k == pl.num_programs(3) - 1)
    def _():
        o_ref[0] = (acc_ref[...] + bias_ref[...]).astype(o_ref.dtype)


def _pallas_conv_matmul(cols, w2d, bias_col, out_dtype):
    """cols: (N, OH*OW, K) bf16, w2d: (OC, K) bf16, bias_col: (OC, 1) f32
       -> (N, OC, OH*OW) out_dtype."""
    N, Msp, K = cols.shape
    OC = w2d.shape[0]
    out_e = jnp.dtype(out_dtype).itemsize

    K128 = _round_up(K, 128)          # K rounded only to the lane granularity
    OC16 = _round_up(OC, 16)          # bf16 sublane packing granularity

    # ---- tile sizing -------------------------------------------------------
    tm = Msp if Msp <= 512 else 512   # spatial (lane) tile of the output

    def _vmem_bytes(tm_, tn_, tk_):
        return (2 * tm_ * tk_ * 2          # A double buffer (bf16)
                + 2 * tn_ * tk_ * 2        # B double buffer (bf16)
                + 2 * tn_ * 4              # bias double buffer
                + 2 * tn_ * tm_ * out_e    # out double buffer
                + tn_ * tm_ * 4)           # f32 accumulator

    # Weight-resident fast path: B block index constant -> weight DMA'd once.
    weight_resident = _vmem_bytes(tm, OC16, K128) <= (20 << 20)
    if weight_resident:
        tn, tk = OC16, K128
    else:
        tn = 256 if OC16 >= 256 else OC16
        tk = next(c for c in (512, 256, 128) if K128 % c == 0)

    OC_pad = _round_up(OC, tn)
    n_m = pl.cdiv(Msp, tm)
    n_oc = OC_pad // tn
    nk = K128 // tk
    mask_k = (K128 != K)

    # ---- zero-pad ONLY the tiny weight / bias (never the im2col matrix) -----
    if OC_pad != OC or K128 != K:
        w2d = jnp.pad(w2d, ((0, OC_pad - OC), (0, K128 - K)))
    if OC_pad != OC:
        bias_col = jnp.pad(bias_col, ((0, OC_pad - OC), (0, 0)))

    grid = (N, n_m, n_oc, nk)

    # ---- advisory cost + VMEM budget ----------------------------------------
    a_bytes = cols.size * cols.dtype.itemsize
    b_bytes = w2d.size * w2d.dtype.itemsize
    bytes_accessed = (a_bytes * n_oc                                   # A streamed per OC tile
                      + b_bytes * (1 if weight_resident else N * n_m)  # B refetch factor
                      + bias_col.size * 4
                      + N * OC * Msp * out_e)
    flops = 2 * N * Msp * K128 * OC_pad

    footprint = _vmem_bytes(tm, tn, tk)
    vmem_limit = int(min(max(footprint + (8 << 20), 16 << 20), 30 << 20))

    kernel = functools.partial(_conv_matmul_kernel, k_valid=K, tk=tk, mask_k=mask_k)

    a_spec = pl.BlockSpec((1, tm, tk), lambda n, i, j, k: (n, i, k))
    b_spec = pl.BlockSpec((tn, tk), lambda n, i, j, k: (j, k))
    if (not weight_resident) and tk == 128:
        # Small K tiles in the streaming fallback: deepen the input pipeline.
        a_spec = pl.BlockSpec((1, tm, tk), lambda n, i, j, k: (n, i, k),
                              pipeline_mode=pl.Buffered(3))
        b_spec = pl.BlockSpec((tn, tk), lambda n, i, j, k: (j, k),
                              pipeline_mode=pl.Buffered(3))

    out = pl.pallas_call(
        kernel,
        out_shape=jax.ShapeDtypeStruct((N, OC, Msp), out_dtype),
        grid_spec=pltpu.PrefetchScalarGridSpec(
            num_scalar_prefetch=0,
            grid=grid,
            in_specs=[
                a_spec,                                              # im2col tile
                b_spec,                                              # weight tile
                pl.BlockSpec((tn, 1), lambda n, i, j, k: (j, 0)),    # bias column tile
            ],
            out_specs=pl.BlockSpec((1, tn, tm), lambda n, i, j, k: (n, j, i)),
            scratch_shapes=[pltpu.VMEM((tn, tm), jnp.float32)],
        ),
        compiler_params=pltpu.CompilerParams(
            dimension_semantics=("parallel", "parallel", "parallel", "arbitrary"),
            vmem_limit_bytes=vmem_limit,
        ),
        cost_estimate=pl.CostEstimate(
            flops=flops, transcendentals=0, bytes_accessed=bytes_accessed),
    )(cols, w2d, bias_col)
    return out


# ---------------------------------------------------------------------------
# im2col glue (ordering matches torch weight.reshape(OC, IC*KH*KW))
# ---------------------------------------------------------------------------
def _im2col(x, kh, kw, stride, padding):
    N, C, H, W = x.shape
    xp = jnp.pad(x, ((0, 0), (0, 0), (padding, padding), (padding, padding)))
    OH = (H + 2 * padding - kh) // stride + 1
    OW = (W + 2 * padding - kw) // stride + 1
    patches = []
    for i in range(kh):
        for j in range(kw):
            patches.append(
                xp[:, :, i:i + stride * OH:stride, j:j + stride * OW:stride]
            )
    # stack -> (N, C, KH*KW, OH, OW); flatten feature dim C-major then (kh, kw)
    p = jnp.stack(patches, axis=2).reshape(N, C * kh * kw, OH, OW)
    cols = p.transpose(0, 2, 3, 1).reshape(N, OH * OW, C * kh * kw)
    return cols, OH, OW
# TODO(synk): fuse patch extraction into the kernel (halo reads via pl.ds) to avoid
#             materializing the KH*KW-inflated im2col matrix in HBM.


# ---------------------------------------------------------------------------
# Mult2D forward (default: quantize=False, sparsity=0)
# ---------------------------------------------------------------------------
@functools.partial(jax.jit, static_argnames=("stride", "padding", "compute_dtype"))
def mult2d_forward(x, weight, bias=None, *, stride=1, padding=0,
                   compute_dtype=jnp.bfloat16):
    """x: (N, IC, H, W), weight: (OC, IC, KH, KW), bias: (OC,) or None."""
    OC, IC, KH, KW = weight.shape
    N = x.shape[0]
    out_dtype = x.dtype

    # bf16 operands (halves HBM/VMEM traffic, 2x+ MXU rate); accumulation stays f32.
    xc = x.astype(compute_dtype)
    wc = weight.astype(compute_dtype)

    cols, OH, OW = _im2col(xc, KH, KW, stride, padding)   # (N, OH*OW, IC*KH*KW) bf16
    w2d = wc.reshape(OC, IC * KH * KW)                    # (OC, IC*KH*KW) bf16 (OC-major)
    if bias is None:
        bias_col = jnp.zeros((OC, 1), dtype=jnp.float32)
    else:
        bias_col = bias.astype(jnp.float32).reshape(OC, 1)

    out = _pallas_conv_matmul(cols, w2d, bias_col, out_dtype)  # (N, OC, OH*OW)
    return out.reshape(N, OC, OH, OW)                          # free reshape -> NCHW


# TODO(synk): quantize=True path (QuantMeasure running-range input quantization +
#             quantize_grad straight-through backward) not implemented; default
#             Mult2D construction uses quantize=False so forward semantics match.
# TODO(synk): sparsity!=0 weight masking is a pure elementwise pre-multiply of the
#             weight; apply `weight * mask` before calling mult2d_forward if needed.


if __name__ == "__main__":
    key = jax.random.PRNGKey(0)
    k_x, k_w = jax.random.split(key, 2)

    # Small shapes consistent with the module: Mult2D(4, 8, 3, stride=1, padding=1, bias=False)
    N, IC, H, W = 2, 4, 16, 16
    OC, KS = 8, 3
    stride, padding = 1, 1

    x = jax.random.normal(k_x, (N, IC, H, W), dtype=jnp.float32)
    weight = jax.random.normal(k_w, (OC, IC, KS, KS), dtype=jnp.float32)  # nn.init.normal_

    out = mult2d_forward(x, weight, None, stride=stride, padding=padding)
    out = jax.block_until_ready(out)

    # Reference with the same operand precision (bf16 operands, f32 accumulation).
    ref = lax.conv_general_dilated(
        x.astype(jnp.bfloat16).astype(jnp.float32),
        weight.astype(jnp.bfloat16).astype(jnp.float32),
        window_strides=(stride, stride),
        padding=[(padding, padding), (padding, padding)],
        dimension_numbers=("NCHW", "OIHW", "NCHW"),
    )
    assert out.shape == ref.shape, (out.shape, ref.shape)
    assert jnp.allclose(out, ref, atol=1e-3, rtol=1e-3), float(jnp.max(jnp.abs(out - ref)))

    # Loose sanity check against the full-precision conv (bf16 rounding only).
    ref_f32 = lax.conv_general_dilated(
        x, weight, window_strides=(stride, stride),
        padding=[(padding, padding), (padding, padding)],
        dimension_numbers=("NCHW", "OIHW", "NCHW"),
    )
    assert jnp.allclose(out, ref_f32, atol=0.5, rtol=0.05)

    print("KERNEL_OK")
</pallas_src>

<mosaic_0001>
module attributes {stable_mosaic.version = 11 : i64} {
  func.func @_conv_matmul_kernel(%arg0: i32, %arg1: i32, %arg2: i32, %arg3: i32, %arg4: memref<1x256x128xbf16, #tpu.memory_space<vmem>>, %arg5: memref<16x128xbf16, #tpu.memory_space<vmem>>, %arg6: memref<16x1xf32, #tpu.memory_space<vmem>>, %arg7: memref<1x16x256xf32, #tpu.memory_space<vmem>>, %arg8: memref<16x256xf32, #tpu.memory_space<vmem>>) attributes {dimension_semantics = [#tpu.dimension_semantics<parallel>, #tpu.dimension_semantics<parallel>, #tpu.dimension_semantics<parallel>, #tpu.dimension_semantics<arbitrary>], iteration_bounds = array<i64: 2, 1, 1, 1>, scalar_prefetch = 0 : i64, scratch_operands = 1 : i64, tpu.core_type = #tpu.core_type<tc>, window_params = [{transform_indices = @transform_0, window_bounds = array<i64: 1, 256, 128>}, {transform_indices = @transform_1, window_bounds = array<i64: 16, 128>}, {transform_indices = @transform_2, window_bounds = array<i64: 16, 1>}, {transform_indices = @transform_3, window_bounds = array<i64: 1, 16, 256>}]} {
    %c0_i32 = arith.constant 0 : i32
    %0 = arith.cmpi eq, %arg3, %c0_i32 : i32
    %1 = arith.extui %0 : i1 to i32
    %c0_i32_0 = arith.constant 0 : i32
    %2 = arith.cmpi ne, %1, %c0_i32_0 : i32
    scf.if %2 {
      %cst_12 = arith.constant 0.000000e+00 : f32
      %21 = vector.broadcast %cst_12 : f32 to vector<16x256xf32>
      %c0_13 = arith.constant 0 : index
      %c0_14 = arith.constant 0 : index
      %22 = vector.load %arg8[%c0_13, %c0_14] : memref<16x256xf32, #tpu.memory_space<vmem>>, vector<16x256xf32>
      tpu.vector_store %arg8[%c0_13, %c0_14], %21 {strides = array<i32>} : memref<16x256xf32, #tpu.memory_space<vmem>>, vector<16x256xf32>,
    } else {
    }
    %c0 = arith.constant 0 : index
    %c0_1 = arith.constant 0 : index
    %c0_2 = arith.constant 0 : index
    %3 = vector.load %arg4[%c0, %c0_1, %c0_2] : memref<1x256x128xbf16, #tpu.memory_space<vmem>>, vector<1x256x128xbf16>
    %4 = vector.shape_cast %3 : vector<1x256x128xbf16> to vector<256x128xbf16>
    %c128_i32 = arith.constant 128 : i32
    %5 = arith.muli %arg3, %c128_i32 : i32
    %6 = tpu.iota {dimensions = array<i32: 1>} : vector<256x128xi32>
    %7 = vector.broadcast %5 : i32 to vector<256x128xi32>
    %8 = arith.addi %7, %6 : vector<256x128xi32>
    %c36_i32 = arith.constant 36 : i32
    %9 = vector.broadcast %c36_i32 : i32 to vector<256x128xi32>
    %10 = arith.cmpi slt, %8, %9 : vector<256x128xi32>
    %cst = arith.constant 0.000000e+00 : bf16
    %11 = vector.broadcast %cst : bf16 to vector<256x128xbf16>
    %12 = arith.select %10, %4, %11 : vector<256x128xi1>, vector<256x128xbf16>
    %c0_3 = arith.constant 0 : index
    %c0_4 = arith.constant 0 : index
    %13 = vector.load %arg8[%c0_3, %c0_4] : memref<16x256xf32, #tpu.memory_space<vmem>>, vector<16x256xf32>
    %c0_5 = arith.constant 0 : index
    %c0_6 = arith.constant 0 : index
    %14 = vector.load %arg5[%c0_5, %c0_6] : memref<16x128xbf16, #tpu.memory_space<vmem>>, vector<16x128xbf16>
    %cst_7 = arith.constant dense<0.000000e+00> : vector<16x256xf32>
    %15 = tpu.matmul %14, %12, %cst_7 {dimension_numbers = #tpu.dot_dimension_numbers<[1], [1], [0], [0], [0, 0, 1, 0], [], []>} : vector<16x128xbf16>, vector<256x128xbf16>, vector<16x256xf32> -> vector<16x256xf32>
    %16 = arith.addf %13, %15 : vector<16x256xf32>
    %c0_8 = arith.constant 0 : index
    %c0_9 = arith.constant 0 : index
    %17 = vector.load %arg8[%c0_8, %c0_9] : memref<16x256xf32, #tpu.memory_space<vmem>>, vector<16x256xf32>
    tpu.vector_store %arg8[%c0_8, %c0_9], %16 {strides = array<i32>} : memref<16x256xf32, #tpu.memory_space<vmem>>, vector<16x256xf32>,
    %c0_i32_10 = arith.constant 0 : i32
    %18 = arith.cmpi eq, %arg3, %c0_i32_10 : i32
    %19 = arith.extui %18 : i1 to i32
    %c0_i32_11 = arith.constant 0 : i32
    %20 = arith.cmpi ne, %19, %c0_i32_11 : i32
    scf.if %20 {
      %c0_12 = arith.constant 0 : index
      %c0_13 = arith.constant 0 : index
      %21 = vector.load %arg8[%c0_12, %c0_13] : memref<16x256xf32, #tpu.memory_space<vmem>>, vector<16x256xf32>
      %c0_14 = arith.constant 0 : index
      %c0_15 = arith.constant 0 : index
      %22 = vector.load %arg6[%c0_14, %c0_15] : memref<16x1xf32, #tpu.memory_space<vmem>>, vector<16x1xf32>
      %23 = vector.broadcast %22 : vector<16x1xf32> to vector<16x256xf32>
      %24 = arith.addf %21, %23 : vector<16x256xf32>
      %c0_16 = arith.constant 0 : index
      %c0_17 = arith.constant 0 : index
      %c0_18 = arith.constant 0 : index
      %25 = vector.load %arg7[%c0_16, %c0_17, %c0_18] : memref<1x16x256xf32, #tpu.memory_space<vmem>>, vector<1x16x256xf32>
      %26 = vector.shape_cast %25 : vector<1x16x256xf32> to vector<16x256xf32>
      %27 = vector.shape_cast %24 : vector<16x256xf32> to vector<1x16x256xf32>
      tpu.vector_store %arg7[%c0_16, %c0_17, %c0_18], %27 {strides = array<i32>} : memref<1x16x256xf32, #tpu.memory_space<vmem>>, vector<1x16x256xf32>,
    } else {
    }
    return
  }
  func.func @transform_0(%arg0: i32, %arg1: i32, %arg2: i32, %arg3: i32) -> (i32, i32, i32) {
    %c0_i32 = arith.constant 0 : i32
    return %arg0, %arg1, %arg3 : i32, i32, i32
  }
  func.func @transform_1(%arg0: i32, %arg1: i32, %arg2: i32, %arg3: i32) -> (i32, i32) {
    %c0_i32 = arith.constant 0 : i32
    return %arg2, %arg3 : i32, i32
  }
  func.func @transform_2(%arg0: i32, %arg1: i32, %arg2: i32, %arg3: i32) -> (i32, i32) {
    %c0_i32 = arith.constant 0 : i32
    %c0_i32_0 = arith.constant 0 : i32
    return %arg2, %c0_i32 : i32, i32
  }
  func.func @transform_3(%arg0: i32, %arg1: i32, %arg2: i32, %arg3: i32) -> (i32, i32, i32) {
    %c0_i32 = arith.constant 0 : i32
    return %arg0, %arg2, %arg1 : i32, i32, i32
  }
}

</mosaic_0001>

<llo_original>
// kernel: mult2d_forward.1
$region0: #{mult2d_forward.1}
  #allocation0 [shape = 'u32[]', space=smem, size = 0x4, offset = 0x4, fixed_abs, tag = 'smem constant byte address 0x4 - core index']
  #allocation1 [shape = 'u32[144,128]{1,0:T(1,128)}', space=vmem, size = 0x12000, scoped, tag = 'internal scratch']
  #allocation2 [shape = 'f32[16,256]{1,0:T(8,128)}', space=vmem, size = 0x4000, scoped, tag = 'scratch operand']
  %s0 = inlined_call_operand.vmem [shape: bf16[2,256,36], index: 0, kind: input, shape index: {}]
  %s1 = inlined_call_operand.vmem [shape: bf16[16,128], index: 1, kind: input, shape index: {}]
  %s2 = inlined_call_operand.vmem [shape: f32[16,1], index: 2, kind: input, shape index: {}]
  %s3 = inlined_call_operand.vmem [shape: f32[2,8,256], index: 3, kind: output, shape index: {}]
  %s4 = sld [smem:[#allocation0]]
  $region72: #{mult2d_forward.1} parent=0
    _
  %s6 = ssub.s32 1, %s4
  %s7 = scalar_select 0, %s6, %s4
  $region1: #{mult2d_forward.1} parent=0
    #allocation3 [shape = 'u8[32768]{0}', space=vmem, size = 0x8000, scoped, tag = 'output window, operand 0']
    loop: start=0, step=1, limit=4
    $region2: #{mult2d_forward.1} parent=1 // loop_pre_header
      _
    $region3: #{mult2d_forward.1} parent=1 // loop_header
      %s9 = sphi 0, %s13
      %p10 = scmp.ge.s32.totalorder %s9, 4
      %s16 = sphi 0, %s42
      %s17 = sphi 0, %s38
      %s18 = sphi 0, %s34
      %s19 = sphi 0, %s30
      %s20 = sphi 0, %s16
      %s21 = sphi 0, %s17
      %s22 = sphi 0, %s18
      %s23 = sphi 0, %s19
      %s24 = sphi 0, %s20
      %s25 = sphi 0, %s21
      %s26 = sphi 0, %s22
      %s27 = sphi 0, %s23
      %s49 = sphi 0, %s51
      %s52 = sphi 0, %s49
      %s53 = sphi 0, %s52
      %s69 = sphi 0, %s53
      %s77 = sphi 0, %s79
      %s80 = sphi 0, %s77
      %s81 = sphi 0, %s80
      %s97 = sphi 0, %s81
      %s103 = sphi 0, %s105
      %s106 = sphi 0, %s103
      %s107 = sphi 0, %s106
      %s123 = sphi 0, %s107
      %s133 = sphi 0, %s135
      %s136 = sphi 0, %s133
      %s137 = sphi 0, %s136
      %s153 = sphi 0, %s137
    $region4: #{mult2d_forward.1} parent=1 // loop_header_branch
      %12 = sbr.rel (%p10) target = $region8
    $region5: #{mult2d_forward.1} parent=1 // loop_body
      %s14 = ssub.s32 %s9, 1
      %s15 = ssub.s32 %s9, 2
      %s28 = sadd.s32 1, %s19
      %p29 = scmp.ge.s32.totalorder %s28, 1
      %s30 = scalar_select %p29, 0, %s28
      %s31 = sadd.s32 1, %s18
      %s32 = scalar_select %p29, %s31, %s18
      %p33 = scmp.ge.s32.totalorder %s32, 1
      %s34 = scalar_select %p33, 0, %s32
      %s35 = sadd.s32 1, %s17
      %s36 = scalar_select %p33, %s35, %s17
      %p37 = scmp.ge.s32.totalorder %s36, 1
      %s38 = scalar_select %p37, 0, %s36
      %s39 = sadd.s32 1, %s16
      %s40 = scalar_select %p37, %s39, %s16
      %p41 = scmp.ge.s32.totalorder %s40, 2
      %s42 = scalar_select %p41, 0, %s40
      %s43 = ssub.s32 %s16, %s42
      %s44 = ssub.s32 %s17, %s38
      %s45 = sor.u32 %s43, %s44
      %s46 = ssub.s32 %s19, %s30
      %s47 = sor.u32 %s45, %s46
      %p48 = scmp.eq.s32.totalorder %s47, 0
      %s50 = sadd.s32 %s49, 1
      %s51 = scalar_select %p48, %s49, %s50
      %p54 = pneg %p48
      %p55 = scmp.eq.s32.totalorder %s9, 1
      %p56 = por %p54, %p55
      %p57 = scmp.ne.s32.totalorder %s49, %s52
      %p58 = scmp.eq.s32.totalorder %s9, 0
      %p59 = por %p57, %p58
      %p60 = scmp.ne.s32.totalorder %s49, %s52
      %p61 = scmp.eq.s32.totalorder %s14, 1
      %p62 = por %p60, %p61
      %p63 = scmp.ne.s32.totalorder %s52, %s53
      %p64 = scmp.eq.s32.totalorder %s14, 0
      %p65 = por %p63, %p64
      %p66 = scmp.ne.s32.totalorder %s52, %s53
      %p67 = scmp.eq.s32.totalorder %s15, 1
      %p68 = por %p66, %p67
      %p70 = scmp.ne.s32.totalorder %s53, %s69
      %p71 = scmp.eq.s32.totalorder %s15, 0
      %p72 = por %p70, %p71
      %s73 = ssub.s32 %s18, %s34
      %s74 = ssub.s32 %s19, %s30
      %s75 = sor.u32 %s73, %s74
      %p76 = scmp.eq.s32.totalorder %s75, 0
      %s78 = sadd.s32 %s77, 1
      %s79 = scalar_select %p76, %s77, %s78
      %p82 = pneg %p76
      %p83 = scmp.eq.s32.totalorder %s9, 1
      %p84 = por %p82, %p83
      %p85 = scmp.ne.s32.totalorder %s77, %s80
      %p86 = scmp.eq.s32.totalorder %s9, 0
      %p87 = por %p85, %p86
      %p88 = scmp.ne.s32.totalorder %s77, %s80
      %p89 = scmp.eq.s32.totalorder %s14, 1
      %p90 = por %p88, %p89
      %p91 = scmp.ne.s32.totalorder %s80, %s81
      %p92 = scmp.eq.s32.totalorder %s14, 0
      %p93 = por %p91, %p92
      %p94 = scmp.ne.s32.totalorder %s80, %s81
      %p95 = scmp.eq.s32.totalorder %s15, 1
      %p96 = por %p94, %p95
      %p98 = scmp.ne.s32.totalorder %s81, %s97
      %p99 = scmp.eq.s32.totalorder %s15, 0
      %p100 = por %p98, %p99
      %s101 = ssub.s32 %s18, %s34
      %p102 = scmp.eq.s32.totalorder %s101, 0
      %s104 = sadd.s32 %s103, 1
      %s105 = scalar_select %p102, %s103, %s104
      %p108 = pneg %p102
      %p109 = scmp.eq.s32.totalorder %s9, 1
      %p110 = por %p108, %p109
      %p111 = scmp.ne.s32.totalorder %s103, %s106
      %p112 = scmp.eq.s32.totalorder %s9, 0
      %p113 = por %p111, %p112
      %p114 = scmp.ne.s32.totalorder %s103, %s106
      %p115 = scmp.eq.s32.totalorder %s14, 1
      %p116 = por %p114, %p115
      %p117 = scmp.ne.s32.totalorder %s106, %s107
      %p118 = scmp.eq.s32.totalorder %s14, 0
      %p119 = por %p117, %p118
      %p120 = scmp.ne.s32.totalorder %s106, %s107
      %p121 = scmp.eq.s32.totalorder %s15, 1
      %p122 = por %p120, %p121
      %p124 = scmp.ne.s32.totalorder %s107, %s123
      %p125 = scmp.eq.s32.totalorder %s15, 0
      %p126 = por %p124, %p125
      %s127 = ssub.s32 %s16, %s42
      %s128 = ssub.s32 %s18, %s34
      %s129 = sor.u32 %s127, %s128
      %s130 = ssub.s32 %s17, %s38
      %s131 = sor.u32 %s129, %s130
      %p132 = scmp.eq.s32.totalorder %s131, 0
      %s134 = sadd.s32 %s133, 1
      %s135 = scalar_select %p132, %s133, %s134
      %p138 = pneg %p132
      %p139 = scmp.eq.s32.totalorder %s9, 1
      %p140 = por %p138, %p139
      %p141 = scmp.ne.s32.totalorder %s133, %s136
      %p142 = scmp.eq.s32.totalorder %s9, 0
      %p143 = por %p141, %p142
      %p144 = scmp.ne.s32.totalorder %s133, %s136
      %p145 = scmp.eq.s32.totalorder %s14, 1
      %p146 = por %p144, %p145
      %p147 = scmp.ne.s32.totalorder %s136, %s137
      %p148 = scmp.eq.s32.totalorder %s14, 0
      %p149 = por %p147, %p148
      %p150 = scmp.ne.s32.totalorder %s136, %s137
      %p151 = scmp.eq.s32.totalorder %s15, 1
      %p152 = por %p150, %p151
      %p154 = scmp.ne.s32.totalorder %s137, %s153
      %p155 = scmp.eq.s32.totalorder %s15, 0
      %p156 = por %p154, %p155
      %p157 = scmp.le.s32.totalorder 1, %s9
      %p158 = scmp.lt.s32.totalorder %s9, 3
      %p159 = pnand %p157, %p158
      %p160 = pneg %p159
      // Predicated region
      $region9: #{mult2d_forward.1} parent=5 // pred_check
        _
      $region10: #{mult2d_forward.1} parent=5 // pred_check_branch
        %162 = sbr.rel (%p159) target = $region12
      $region11: #{mult2d_forward.1} parent=5 // pred_region
        %s163 = ssub.s32 %s9, 1
        // Predicated region
        $region13: #{mult2d_forward.1} parent=11 // pred_check
          %p164 = pneg %p93
        $region14: #{mult2d_forward.1} parent=11 // pred_check_branch
          %166 = sbr.rel (%p164) target = $region16
        $region15: #{mult2d_forward.1} parent=11 // pred_region
          %s167 = smul.u32 2, %s22
          %p168 = scmp.lt.s32.totalorder %s167, 1
          %s169 = scalar_select %p168, %s167, 1
          %p170 = scmp.lt.s32.totalorder %s23, 0
          %s171 = scalar_select %p170, %s23, 0
          %s172 = sadd.s32 %s171, %s169
          %s173 = smul.addr %s172, 4
          %s174 = scalar_lea.vmem %s1, %s173
          %s175 = smul.u32 2, %s22
        $region16: #{mult2d_forward.1} parent=11 // pred_fallthru
          _
        // Predicated region
        $region17: #{mult2d_forward.1} parent=11 // pred_check
          %p176 = pneg %p119
        $region18: #{mult2d_forward.1} parent=11 // pred_check_branch
          %178 = sbr.rel (%p176) target = $region20
        $region19: #{mult2d_forward.1} parent=11 // pred_region
          %s179 = smul.u32 2, %s22
          %p180 = scmp.lt.s32.totalorder %s179, 1
          %s181 = scalar_select %p180, %s179, 1
          %s182 = smul.addr %s181, 8
          %s183 = scalar_lea.vmem %s2, %s182
          %s184 = smul.u32 2, %s22
        $region20: #{mult2d_forward.1} parent=11 // pred_fallthru
          _
      $region12: #{mult2d_forward.1} parent=5 // pred_fallthru
        _
      %p185 = scmp.lt.s32.totalorder %s9, 2
      // Predicated region
      $region21: #{mult2d_forward.1} parent=5 // pred_check
        %p186 = pneg %p185
      $region22: #{mult2d_forward.1} parent=5 // pred_check_branch
        %188 = sbr.rel (%p186) target = $region24
      $region23: #{mult2d_forward.1} parent=5 // pred_region
        // Predicated region
        $region25: #{mult2d_forward.1} parent=23 // pred_check
          %p189 = pneg %p59
        $region26: #{mult2d_forward.1} parent=23 // pred_check_branch
          %191 = sbr.rel (%p189) target = $region28
        $region27: #{mult2d_forward.1} parent=23 // pred_region
          %s192 = smul.u32 32, %s17
          %p193 = scmp.lt.s32.totalorder %s16, 1
          %s194 = scalar_select %p193, %s16, 1
          %p195 = scmp.lt.s32.totalorder %s192, 31
          %s196 = scalar_select %p195, %s192, 31
          %p197 = scmp.lt.s32.totalorder %s19, 0
          %s198 = scalar_select %p197, %s19, 0
          %s199 = sadd.s32 %s198, %s196
          %s200 = smul.addr %s194, 32
          %s201 = sadd.s32 %s199, %s200
          %s202 = smul.addr %s201, 4
          %s203 = scalar_lea.vmem %s0, %s202
          %s204 = smul.u32 32, %s17
        $region28: #{mult2d_forward.1} parent=23 // pred_fallthru
          _
      $region24: #{mult2d_forward.1} parent=5 // pred_fallthru
        _
      %p205 = scmp.le.s32.totalorder 1, %s9
      %p206 = scmp.lt.s32.totalorder %s9, 3
      %p207 = pnand %p205, %p206
      %p208 = pneg %p207
      // Predicated region
      $region29: #{mult2d_forward.1} parent=5 // pred_check
        _
      $region30: #{mult2d_forward.1} parent=5 // pred_check_branch
        %210 = sbr.rel (%p207) target = $region32
      $region31: #{mult2d_forward.1} parent=5 // pred_region
        %s211 = ssub.s32 %s9, 1
        %s212 = smul.u32 32, %s21
        %p213 = scmp.lt.s32.totalorder %s20, 1
        %s214 = scalar_select %p213, %s20, 1
        %p215 = scmp.lt.s32.totalorder %s212, 31
        %s216 = scalar_select %p215, %s212, 31
        %p217 = scmp.lt.s32.totalorder %s23, 0
        %s218 = scalar_select %p217, %s23, 0
        %s219 = sadd.s32 %s218, %s216
        %s220 = smul.addr %s214, 32
        %s221 = sadd.s32 %s219, %s220
        %s222 = smul.addr %s221, 4
        %s223 = scalar_lea.vmem %s0, %s222
        %p224 = pneg %p65
        %p225 = pneg %p62
        %s226 = smul.u32 2, %s22
        %p227 = scmp.lt.s32.totalorder %s226, 1
        %s228 = scalar_select %p227, %s226, 1
        %p229 = scmp.lt.s32.totalorder %s23, 0
        %s230 = scalar_select %p229, %s23, 0
        %s231 = sadd.s32 %s230, %s228
        %s232 = smul.addr %s231, 4
        %s233 = scalar_lea.vmem %s1, %s232
        %p234 = pneg %p93
        %p235 = pneg %p90
        %s236 = smul.u32 2, %s22
        %p237 = scmp.lt.s32.totalorder %s236, 1
        %s238 = scalar_select %p237, %s236, 1
        %s239 = smul.addr %s238, 8
        %s240 = scalar_lea.vmem %s2, %s239
        %p241 = pneg %p119
        %p242 = pneg %p116
        %p243 = pneg %p149
        %p244 = pneg %p146
        %s245 = sand.u32 %s136, 1
        %s246 = sand.u32 %s136, 1
        %s247 = smul.addr %s246, 32
        %s248 = scalar_lea.vmem [#allocation3], %s247
        %s249 = smul.u32 32, %s21
        %p250 = scmp.lt.s32.totalorder %s20, 1
        %s251 = scalar_select %p250, %s20, 1
        %p252 = scmp.lt.s32.totalorder %s249, 31
        %s253 = scalar_select %p252, %s249, 31
        %p254 = scmp.lt.s32.totalorder %s23, 0
        %s255 = scalar_select %p254, %s23, 0
        %s256 = sadd.s32 %s255, %s253
        %s257 = smul.addr %s251, 32
        %s258 = sadd.s32 %s256, %s257
        %s259 = smul.addr %s258, 4
        %s260 = scalar_lea.vmem %s0, %s259
        %s261 = smul.u32 32, %s21
        %s262 = smul.u32 2, %s22
        %p263 = scmp.lt.s32.totalorder %s262, 1
        %s264 = scalar_select %p263, %s262, 1
        %p265 = scmp.lt.s32.totalorder %s23, 0
        %s266 = scalar_select %p265, %s23, 0
        %s267 = sadd.s32 %s266, %s264
        %s268 = smul.addr %s267, 4
        %s269 = scalar_lea.vmem %s1, %s268
        %s270 = smul.u32 2, %s22
        %s271 = smul.u32 2, %s22
        %p272 = scmp.lt.s32.totalorder %s271, 1
        %s273 = scalar_select %p272, %s271, 1
        %s274 = smul.addr %s273, 8
        %s275 = scalar_lea.vmem %s2, %s274
        %s276 = smul.u32 2, %s22
        %s277 = smul.u32 2, %s22
        %s278 = smul.u32 2, %s21
        %s279 = ssub.s32 1, %s277
        %s280 = smul.u32 128, %s279
        %s281 = smul.u32 %s280, 2
        %p283 = scmp.eq.s32.totalorder %s23, 0
        // Predicated region
        $region33: #{mult2d_forward.1} parent=31 // pred_check
          %p284 = pneg %p283
        $region34: #{mult2d_forward.1} parent=31 // pred_check_branch
          %286 = sbr.rel (%p284) target = $region36
        $region35: #{mult2d_forward.1} parent=31 // pred_region
          %287 = vst [vmem:[#allocation2] sm:$0xff] 0.0
          %288 = vst [vmem:[#allocation2 + $0x8] sm:$0xff] 0.0
          %289 = vst [vmem:[#allocation2 + $0x10] sm:$0xff] 0.0
          %290 = vst [vmem:[#allocation2 + $0x18] sm:$0xff] 0.0
        $region36: #{mult2d_forward.1} parent=31 // pred_fallthru
          _
        %v291 = vld [vmem:[%s260] sm:$0xf]
        %v292 = vld [vmem:[%s260 + $0x4] sm:$0xf]
        %v293 = vld [vmem:[%s260 + $0x8] sm:$0xf]
        %v294 = vld [vmem:[%s260 + $0xc] sm:$0xf]
        %v295 = vld [vmem:[%s260 + $0x10] sm:$0xf]
        %v296 = vld [vmem:[%s260 + $0x14] sm:$0xf]
        %v297 = vld [vmem:[%s260 + $0x18] sm:$0xf]
        %v298 = vld [vmem:[%s260 + $0x1c] sm:$0xf]
        %v299 = vld [vmem:[%s260 + $0x20] sm:$0xf]
        %v300 = vld [vmem:[%s260 + $0x24] sm:$0xf]
        %v301 = vld [vmem:[%s260 + $0x28] sm:$0xf]
        %v302 = vld [vmem:[%s260 + $0x2c] sm:$0xf]
        %v303 = vld [vmem:[%s260 + $0x30] sm:$0xf]
        %v304 = vld [vmem:[%s260 + $0x34] sm:$0xf]
        %v305 = vld [vmem:[%s260 + $0x38] sm:$0xf]
        %v306 = vld [vmem:[%s260 + $0x3c] sm:$0xf]
        %v307 = vld [vmem:[%s260 + $0x40] sm:$0xf]
        %v308 = vld [vmem:[%s260 + $0x44] sm:$0xf]
        %v309 = vld [vmem:[%s260 + $0x48] sm:$0xf]
        %v310 = vld [vmem:[%s260 + $0x4c] sm:$0xf]
        %v311 = vld [vmem:[%s260 + $0x50] sm:$0xf]
        %v312 = vld [vmem:[%s260 + $0x54] sm:$0xf]
        %v313 = vld [vmem:[%s260 + $0x58] sm:$0xf]
        %v314 = vld [vmem:[%s260 + $0x5c] sm:$0xf]
        %v315 = vld [vmem:[%s260 + $0x60] sm:$0xf]
        %v316 = vld [vmem:[%s260 + $0x64] sm:$0xf]
        %v317 = vld [vmem:[%s260 + $0x68] sm:$0xf]
        %v318 = vld [vmem:[%s260 + $0x6c] sm:$0xf]
        %v319 = vld [vmem:[%s260 + $0x70] sm:$0xf]
        %v320 = vld [vmem:[%s260 + $0x74] sm:$0xf]
        %v321 = vld [vmem:[%s260 + $0x78] sm:$0xf]
        %v322 = vld [vmem:[%s260 + $0x7c] sm:$0xf]
        %s323 = smul.u32 %s23, 128
        %v324 = vlaneseq
        %v325 = vand.u32 %v324, 127
        %v326 = vstv %s323
        %v327 = vadd.s32 %v326, %v325
        %vm328 = vcmp.lt.s32.totalorder %v327, 36
        %vm329 = vmpackc.low %vm328, %vm328
        %v330 = vsel %vm329, %v291, 0
        %v331 = vsel %vm329, %v292, 0
        %v332 = vsel %vm329, %v293, 0
        %v333 = vsel %vm329, %v294, 0
        %v334 = vsel %vm329, %v295, 0
        %v335 = vsel %vm329, %v296, 0
        %v336 = vsel %vm329, %v297, 0
        %v337 = vsel %vm329, %v298, 0
        %v338 = vsel %vm329, %v299, 0
        %v339 = vsel %vm329, %v300, 0
        %v340 = vsel %vm329, %v301, 0
        %v341 = vsel %vm329, %v302, 0
        %v342 = vsel %vm329, %v303, 0
        %v343 = vsel %vm329, %v304, 0
        %v344 = vsel %vm329, %v305, 0
        %v345 = vsel %vm329, %v306, 0
        %v346 = vsel %vm329, %v307, 0
        %v347 = vsel %vm329, %v308, 0
        %v348 = vsel %vm329, %v309, 0
        %v349 = vsel %vm329, %v310, 0
        %v350 = vsel %vm329, %v311, 0
        %v351 = vsel %vm329, %v312, 0
        %v352 = vsel %vm329, %v313, 0
        %v353 = vsel %vm329, %v314, 0
        %v354 = vsel %vm329, %v315, 0
        %v355 = vsel %vm329, %v316, 0
        %v356 = vsel %vm329, %v317, 0
        %v357 = vsel %vm329, %v318, 0
        %v358 = vsel %vm329, %v319, 0
        %v359 = vsel %vm329, %v320, 0
        %v360 = vsel %vm329, %v321, 0
        %v361 = vsel %vm329, %v322, 0
        %v362 = vld [vmem:[#allocation2] sm:$0xff]
        %v363 = vld [vmem:[#allocation2 + $0x8] sm:$0xff]
        %v364 = vld [vmem:[#allocation2 + $0x10] sm:$0xff]
        %v365 = vld [vmem:[#allocation2 + $0x18] sm:$0xff]
        %v366 = vld [vmem:[%s269] sm:$0xf]
        %v367 = vld [vmem:[%s269 + $0x4] sm:$0xf]
        %v370 = vunpack.c.l.b16 %v366
        %v371 = vunpack.c.l.b16 %v367
        %v372 = vpack.c.b16 %v371, %v370
        %v406 = vunpack.c.l.b16 %v330
        %v407 = vunpack.c.l.b16 %v331
        %v408 = vunpack.c.l.b16 %v332
        %v409 = vunpack.c.l.b16 %v333
        %v410 = vunpack.c.l.b16 %v334
        %v411 = vunpack.c.l.b16 %v335
        %v412 = vunpack.c.l.b16 %v336
        %v413 = vunpack.c.l.b16 %v337
        %v414 = vunpack.c.l.b16 %v338
        %v415 = vunpack.c.l.b16 %v339
        %v416 = vunpack.c.l.b16 %v340
        %v417 = vunpack.c.l.b16 %v341
        %v418 = vunpack.c.l.b16 %v342
        %v419 = vunpack.c.l.b16 %v343
        %v420 = vunpack.c.l.b16 %v344
        %v421 = vunpack.c.l.b16 %v345
        %v422 = vunpack.c.l.b16 %v346
        %v423 = vunpack.c.l.b16 %v347
        %v424 = vunpack.c.l.b16 %v348
        %v425 = vunpack.c.l.b16 %v349
        %v426 = vunpack.c.l.b16 %v350
        %v427 = vunpack.c.l.b16 %v351
        %v428 = vunpack.c.l.b16 %v352
        %v429 = vunpack.c.l.b16 %v353
        %v430 = vunpack.c.l.b16 %v354
        %v431 = vunpack.c.l.b16 %v355
        %v432 = vunpack.c.l.b16 %v356
        %v433 = vunpack.c.l.b16 %v357
        %v434 = vunpack.c.l.b16 %v358
        %v435 = vunpack.c.l.b16 %v359
        %v436 = vunpack.c.l.b16 %v360
        %v437 = vunpack.c.l.b16 %v361
        %v438 = vpack.c.b16 %v407, %v406
        %v439 = vpack.c.b16 %v409, %v408
        %v440 = vpack.c.b16 %v411, %v410
        %v441 = vpack.c.b16 %v413, %v412
        %v442 = vpack.c.b16 %v415, %v414
        %v443 = vpack.c.b16 %v417, %v416
        %v444 = vpack.c.b16 %v419, %v418
        %v445 = vpack.c.b16 %v421, %v420
        %v446 = vpack.c.b16 %v423, %v422
        %v447 = vpack.c.b16 %v425, %v424
        %v448 = vpack.c.b16 %v427, %v426
        %v449 = vpack.c.b16 %v429, %v428
        %v450 = vpack.c.b16 %v431, %v430
        %v451 = vpack.c.b16 %v433, %v432
        %v452 = vpack.c.b16 %v435, %v434
        %v453 = vpack.c.b16 %v437, %v436
        %470 = vmatprep.subr.bf16.mxu0 0
        %471 = vmatpush1.bf16.xpose.msra.mxu0 %v445
        %472 = vmatprep.subr.bf16.mxu0 0
        %473 = vmatpush1.bf16.xpose.msra.mxu0 %v444
        %474 = vmatprep.subr.bf16.mxu0 0
        %475 = vmatpush1.bf16.xpose.msra.mxu0 %v443
        %476 = vmatprep.subr.bf16.mxu0 0
        %477 = vmatpush1.bf16.xpose.msra.mxu0 %v442
        %478 = vmatprep.subr.bf16.mxu0 0
        %479 = vmatpush1.bf16.xpose.msra.mxu0 %v441
        %480 = vmatprep.subr.bf16.mxu0 0
        %481 = vmatpush1.bf16.xpose.msra.mxu0 %v440
        %482 = vmatprep.subr.bf16.mxu0 0
        %483 = vmatpush1.bf16.xpose.msra.mxu0 %v439
        %484 = vmatprep.subr.bf16.mxu0 0
        %485 = vmatpush1.bf16.xpose.msra.mxu0 %v438
        %486 = vmatprep.subr.bf16.mxu0 0
        %487 = vmatpush2.bf16.xpose.msra.mxu0 %v453
        %488 = vmatprep.subr.bf16.mxu0 0
        %489 = vmatpush2.bf16.xpose.msra.mxu0 %v452
        %490 = vmatprep.subr.bf16.mxu0 0
        %491 = vmatpush2.bf16.xpose.msra.mxu0 %v451
        %492 = vmatprep.subr.bf16.mxu0 0
        %493 = vmatpush2.bf16.xpose.msra.mxu0 %v450
        %494 = vmatprep.subr.bf16.mxu0 0
        %495 = vmatpush2.bf16.xpose.msra.mxu0 %v449
        %496 = vmatprep.subr.bf16.mxu0 0
        %497 = vmatpush2.bf16.xpose.msra.mxu0 %v448
        %498 = vmatprep.subr.bf16.mxu0 0
        %499 = vmatpush2.bf16.xpose.msra.mxu0 %v447
        %500 = vmatprep.subr.bf16.mxu0 0
        %501 = vmatpush2.bf16.xpose.msra.mxu0 %v446
        %502 = vmatprep.mubr.bf16.mxu0 0
        %503 = vmatmul.mubr.bf16.gmra.mxu0 %v372
        %v504 = vpop.f32.mrf.mxu0
        %v505 = vadd.f32 0.0, %v504
        %v506 = vpop.f32.mrf.mxu0
        %v507 = vadd.f32 0.0, %v506
        %v508 = vpop.f32.mrf.mxu0
        %v509 = vadd.f32 0.0, %v508
        %v510 = vpop.f32.mrf.mxu0
        %v511 = vadd.f32 0.0, %v510
        %512 = vdwg.mxu0
        %v513 = vadd.f32 %v362, %v505
        %v514 = vadd.f32 %v363, %v507
        %v515 = vadd.f32 %v364, %v509
        %v516 = vadd.f32 %v365, %v511
        %517 = vst [vmem:[#allocation2] sm:$0xff] %v513
        %518 = vst [vmem:[#allocation2 + $0x8] sm:$0xff] %v514
        %519 = vst [vmem:[#allocation2 + $0x10] sm:$0xff] %v515
        %520 = vst [vmem:[#allocation2 + $0x18] sm:$0xff] %v516
        // Predicated region
        $region37: #{mult2d_forward.1} parent=31 // pred_check
          %p521 = pneg %p283
        $region38: #{mult2d_forward.1} parent=31 // pred_check_branch
          %523 = sbr.rel (%p521) target = $region40
        $region39: #{mult2d_forward.1} parent=31 // pred_region
          %v524 = vld [vmem:[#allocation2] sm:$0xff]
          %v525 = vld [vmem:[#allocation2 + $0x8] sm:$0xff]
          %v526 = vld [vmem:[#allocation2 + $0x10] sm:$0xff]
          %v527 = vld [vmem:[#allocation2 + $0x18] sm:$0xff]
          %v528 = vld [vmem:[%s275] sm:$0xff]
          %v529 = vld [vmem:[%s275 + $0x8] sm:$0xff]
          %531 = vset.pattern.permute.xlu0 0
          %532 = vperm.xlu0 %531, %v528
          %v533 = vpop.permute.xlu0 %532
          %536 = vset.pattern.permute.xlu0 0
          %537 = vperm.xlu0 %536, %v529
          %v538 = vpop.permute.xlu0 %537
          %v540 = vadd.f32 %v524, %v533
          %v541 = vadd.f32 %v525, %v533
          %v542 = vadd.f32 %v526, %v538
          %v543 = vadd.f32 %v527, %v538
          %544 = vst [vmem:[%s248] sm:$0xff] %v540
          %545 = vst [vmem:[%s248 + $0x8] sm:$0xff] %v541
          %546 = vst [vmem:[%s248 + $0x10] sm:$0xff] %v542
          %547 = vst [vmem:[%s248 + $0x18] sm:$0xff] %v543
        $region40: #{mult2d_forward.1} parent=31 // pred_fallthru
          _
        %s548 = sand.u32 %s136, 1
        %s549 = sand.u32 %s136, 1
        %s550 = smul.addr %s549, 32
        %s551 = scalar_lea.vmem [#allocation3], %s550
        // Predicated region
        $region41: #{mult2d_forward.1} parent=31 // pred_check
          %p552 = pneg %p146
        $region42: #{mult2d_forward.1} parent=31 // pred_check_branch
          %554 = sbr.rel (%p552) target = $region44
        $region43: #{mult2d_forward.1} parent=31 // pred_region
          %s555 = smul.u32 2, %s22
          %s556 = smul.u32 2, %s21
          %s557 = ssub.s32 1, %s555
          %s558 = smul.u32 128, %s557
          %s559 = smul.u32 %s558, 2
          %p560 = scmp.ne.s32.totalorder 0, %s559
          %s561 = smul.addr %s555, 2
          %s562 = sadd.s32 %s556, %s561
          %s563 = smul.addr %s20, 2
          %s564 = sadd.s32 %s562, %s563
          %s565 = smul.addr %s564, 8
          %s566 = scalar_lea.vmem %s3, %s565
          // Predicated region
          $region45: #{mult2d_forward.1} parent=43 // pred_check
            %p567 = pneg %p560
          $region46: #{mult2d_forward.1} parent=43 // pred_check_branch
            %569 = sbr.rel (%p567) target = $region48
          $region47: #{mult2d_forward.1} parent=43 // pred_region
            // Predicated region
            $region49: #{mult2d_forward.1} parent=47 // pred_check
              _
            $region50: #{mult2d_forward.1} parent=47 // pred_check_branch
              %571 = sbr.rel (0) target = $region52
            $region51: #{mult2d_forward.1} parent=47 // pred_region
              // While loop
              $region53: #{mult2d_forward.1} parent=51 // loop_pre_header
                _
              $region54: #{mult2d_forward.1} parent=51 // loop_header
                %s573 = sphi 0, %s575
                %p574 = scmp.ge.s32.totalorder %s573, %s557
                %s578 = sphi 0, %s587
                %s579 = sphi %s551, %s590
                %s580 = sphi %s566, %s591
              $region55: #{mult2d_forward.1} parent=51 // loop_header_branch
                %577 = sbr.rel (%p574) target = $region59
              $region56: #{mult2d_forward.1} parent=51 // loop_body
                %v581 = vld [vmem:[%s579] sm:$0xff]
                %582 = vst [vmem:[%s580] sm:$0xff] %v581
                %v583 = vld [vmem:[%s579 + $0x8] sm:$0xff]
                %584 = vst [vmem:[%s580 + $0x8] sm:$0xff] %v583
                %s585 = sadd.s32 1, %s578
                %p586 = scmp.ge.s32.totalorder %s585, %s557
                %s587 = scalar_select %p586, 0, %s585
                %s588 = smul.u32 %s587, 16
                %s589 = smul.u32 %s587, 16
                %s590 = scalar_lea.vmem %s551, %s588 [#allocation3]
                %s591 = scalar_lea.vmem %s566, %s589
              $region57: #{mult2d_forward.1} parent=51 // loop_footer
                %s575 = sadd.s32 %s573, 1
              $region58: #{mult2d_forward.1} parent=51 // loop_footer_branch
                %572 = sbr.rel target = $region54
              $region59: #{mult2d_forward.1} parent=51 // loop_exit
                _
            $region52: #{mult2d_forward.1} parent=47 // pred_fallthru
              _
            // Predicated region
            $region60: #{mult2d_forward.1} parent=47 // pred_check
              _
            $region61: #{mult2d_forward.1} parent=47 // pred_check_branch
              %593 = sbr.rel target = $region63
            $region62: #{mult2d_forward.1} parent=47 // pred_region
              _
            $region63: #{mult2d_forward.1} parent=47 // pred_fallthru
              _
          $region48: #{mult2d_forward.1} parent=43 // pred_fallthru
            _
          %594 = vnop
        $region44: #{mult2d_forward.1} parent=31 // pred_fallthru
          _
      $region32: #{mult2d_forward.1} parent=5 // pred_fallthru
        _
      %p595 = scmp.le.s32.totalorder 2, %s9
      // Predicated region
      $region64: #{mult2d_forward.1} parent=5 // pred_check
        %p596 = pneg %p595
      $region65: #{mult2d_forward.1} parent=5 // pred_check_branch
        %598 = sbr.rel (%p596) target = $region67
      $region66: #{mult2d_forward.1} parent=5 // pred_region
        %s599 = ssub.s32 %s9, 2
        // Predicated region
        $region68: #{mult2d_forward.1} parent=66 // pred_check
          %p600 = pneg %p152
        $region69: #{mult2d_forward.1} parent=66 // pred_check_branch
          %602 = sbr.rel (%p600) target = $region71
        $region70: #{mult2d_forward.1} parent=66 // pred_region
          %s603 = sand.u32 %s137, 1
          %s604 = sand.u32 %s137, 1
          %s605 = smul.addr %s604, 32
          %s606 = scalar_lea.vmem [#allocation3], %s605
        $region71: #{mult2d_forward.1} parent=66 // pred_fallthru
          _
      $region67: #{mult2d_forward.1} parent=5 // pred_fallthru
        _
    $region6: #{mult2d_forward.1} parent=1 // loop_footer
      %s13 = sadd.s32 1, %s9
    $region7: #{mult2d_forward.1} parent=1 // loop_footer_branch
      %8 = sbr.rel target = $region3
    $region8: #{mult2d_forward.1} parent=1 // loop_exit
      _

</llo_original>
